<compile_context>
chip_gen: v7x
topology: tpu7x:2x2x1
jax: 0.10.0
libtpu: 0.0.40
codegen_flags: <defaults>
</compile_context>

<pallas_src>
import functools

import jax
import jax.numpy as jnp
from jax.experimental import pallas as pl
from jax.experimental.pallas import tpu as pltpu


def _round_up(a: int, b: int) -> int:
    return (a + b - 1) // b * b


# ----------------------------------------------------------------------------
# Kernel: one fused 3-layer MLP, one lane-dense packed (TB, OUT) output slab.
# Column layout per row:  [0, K)            -> log_pi
#                         [K, K+KD)         -> mu
#                         [K+KD, K+2KD)     -> sigma
#                         [K+2KD, OUT)      -> junk pads (never read back)
# ----------------------------------------------------------------------------
def mdn_fused_kernel(x_ref, w0_ref, b0_ref, w1_ref, b1_ref, w2_ref, b2_ref,
                     out_ref, *, eps, k, kd):
    # bf16 activations / weights, f32 accumulation on the MXU.
    x = x_ref[...]
    h = jnp.tanh(jnp.dot(x, w0_ref[...],
                         preferred_element_type=jnp.float32) + b0_ref[...])
    h = h.astype(x.dtype)
    h = jnp.tanh(jnp.dot(h, w1_ref[...],
                         preferred_element_type=jnp.float32) + b1_ref[...])
    h = h.astype(x.dtype)
    z = jnp.dot(h, w2_ref[...],
                preferred_element_type=jnp.float32) + b2_ref[...]   # (TB, OUT) f32

    lane = jax.lax.broadcasted_iota(jnp.int32, z.shape, 1)
    is_pi = lane < k
    is_sigma = (lane >= k + kd) & (lane < k + 2 * kd)

    # log_softmax restricted to the pi lanes (mu/sigma/pad lanes masked out of
    # the max and the exp-sum; the masked fill never reaches the output).
    neg = jnp.float32(-1e30)
    mx = jnp.max(jnp.where(is_pi, z, neg), axis=-1, keepdims=True)
    sh = z - mx
    sumexp = jnp.sum(jnp.where(is_pi, jnp.exp(sh), 0.0), axis=-1, keepdims=True)
    log_pi = sh - jnp.log(sumexp)

    # sigma = exp(raw + eps)  (NoiseType.DIAGONAL).  Computed full-width on the
    # otherwise-idle EUP slot and selected by lane mask; mu lanes pass z
    # through unchanged.  Single unmasked lane-dense store.
    sigma = jnp.exp(z + eps)
    out = jnp.where(is_pi, log_pi, jnp.where(is_sigma, sigma, z))
    out_ref[...] = out.astype(out_ref.dtype)


# ----------------------------------------------------------------------------
# Weight packing: fuse the two MLPs, pad hidden widths to 128 lanes, and pack
# the head columns [pi | mu | sigma] contiguously into one lane-aligned block.
# ----------------------------------------------------------------------------
def pack_mdn_params(params, *, num_components, dim_out,
                    weight_dtype=jnp.bfloat16):
    K, D = num_components, dim_out
    KD = K * D

    pw0, pb0 = params["pw0"], params["pb0"]
    pw1, pb1 = params["pw1"], params["pb1"]
    pw2, pb2 = params["pw2"], params["pb2"]
    nw0, nb0 = params["nw0"], params["nb0"]
    nw1, nb1 = params["nw1"], params["nb1"]
    nw2, nb2 = params["nw2"], params["nb2"]

    # Shape sanity: weights are (in, out) = nn.Linear.weight transposed.
    assert pw0.shape[0] == nw0.shape[0], "dim_in mismatch between networks"
    assert pw2.shape[1] == K, "pi head must output num_components logits"
    assert nw2.shape[1] == 2 * KD, "normal head must output 2*K*D (DIAGONAL)"
    H0p, H0n = pw0.shape[1], nw0.shape[1]
    H1p, H1n = pw1.shape[1], nw1.shape[1]
    assert (H0p, H1p) == (H0n, H1n), "pi/normal hidden sizes must match"

    dim_in = pw0.shape[0]
    H0, H1 = H0p + H0n, H1p + H1n
    H0_pad = _round_up(H0, 128)          # lane-dense intermediates
    H1_pad = _round_up(H1, 128)
    OUT = _round_up(K + 2 * KD, 128)     # single compressed output block
    f32 = jnp.float32

    # Layer 0: concatenate outputs, zero-pad to H0_pad.
    w0 = jnp.zeros((dim_in, H0_pad), f32)
    w0 = w0.at[:, :H0p].set(pw0).at[:, H0p:H0].set(nw0)
    b0 = jnp.zeros((1, H0_pad), f32)
    b0 = b0.at[:, :H0p].set(pb0).at[:, H0p:H0].set(nb0)

    # Layer 1: block-diagonal, zero-padded.
    w1 = jnp.zeros((H0_pad, H1_pad), f32)
    w1 = w1.at[:H0p, :H1p].set(pw1).at[H0p:H0, H1p:H1].set(nw1)
    b1 = jnp.zeros((1, H1_pad), f32)
    b1 = b1.at[:, :H1p].set(pb1).at[:, H1p:H1].set(nb1)

    # Layer 2: block-diagonal rows, contiguous [pi | mu | sigma] columns.
    w2 = jnp.zeros((H1_pad, OUT), f32)
    w2 = w2.at[:H1p, :K].set(pw2)                               # pi logits
    w2 = w2.at[H1p:H1, K:K + KD].set(nw2[:, :KD])               # mu
    w2 = w2.at[H1p:H1, K + KD:K + 2 * KD].set(nw2[:, KD:])      # sigma (pre-exp)
    b2 = jnp.zeros((1, OUT), f32)
    b2 = b2.at[:, :K].set(pb2)
    b2 = b2.at[:, K:K + KD].set(nb2[:, :KD])
    b2 = b2.at[:, K + KD:K + 2 * KD].set(nb2[:, KD:])
    # Pad lanes [K+2KD, OUT) keep zero weight/bias; they are excluded from the
    # in-kernel softmax by the lane mask and never read back.

    packed = (w0.astype(weight_dtype), b0,          # biases stay f32 (added to
              w1.astype(weight_dtype), b1,          # the f32 accumulator)
              w2.astype(weight_dtype), b2)
    return packed, OUT


# ----------------------------------------------------------------------------
# Wrapper
# ----------------------------------------------------------------------------
def mdn_forward(x, packed, out_width, *, num_components, dim_out, eps=1e-6,
                batch_tile=1024, min_grid_steps=2):
    w0, b0, w1, b1, w2, b2 = packed
    K, D = num_components, dim_out
    KD = K * D
    B, dim_in = x.shape
    OUT = out_width

    x_in = x.astype(w0.dtype)   # bf16 halves x HBM traffic; matmuls accumulate f32

    # Batch tile: largest 8-aligned tile that fits `batch_tile` AND produces at
    # least `min_grid_steps` grid steps when B permits (keeps both v7x
    # TensorCores busy; harmless ~0.35us/step on single-TC chips).
    if B <= 8:
        TB = B
    else:
        TB = min(batch_tile, (B // 8) * 8)
        if min_grid_steps > 1:
            TB = min(TB, max(8, _round_up(pl.cdiv(B, min_grid_steps), 8)))
    grid = (pl.cdiv(B, TB),)
    # NOTE: when B % TB != 0 the final step runs tanh/exp on Pallas-padded
    # garbage rows; results are discarded and TPUs don't trap on inf/NaN.

    def fixed(arr):  # weights/biases: constant block, stays VMEM-resident
        return pl.BlockSpec(arr.shape, lambda i: (0, 0))

    in_specs = [
        pl.BlockSpec((TB, dim_in), lambda i: (i, 0)),
        fixed(w0), fixed(b0), fixed(w1), fixed(b1), fixed(w2), fixed(b2),
    ]
    out_specs = pl.BlockSpec((TB, OUT), lambda i: (i, 0))

    H0_pad, H1_pad = w0.shape[1], w1.shape[1]
    flops = 2 * B * (dim_in * H0_pad + H0_pad * H1_pad + H1_pad * OUT)
    transcendentals = B * (H0_pad + H1_pad + 2 * OUT + 1)
    weight_bytes = sum(int(a.size) * a.dtype.itemsize
                       for a in (w0, b0, w1, b1, w2, b2))
    bytes_accessed = (B * dim_in * x_in.dtype.itemsize
                      + weight_bytes + 4 * B * OUT)

    out = pl.pallas_call(
        functools.partial(mdn_fused_kernel, eps=eps, k=K, kd=KD),
        grid=grid,
        in_specs=in_specs,
        out_specs=out_specs,
        out_shape=jax.ShapeDtypeStruct((B, OUT), jnp.float32),
        compiler_params=pltpu.CompilerParams(
            dimension_semantics=("parallel",)),
        cost_estimate=pl.CostEstimate(
            flops=flops, transcendentals=transcendentals,
            bytes_accessed=bytes_accessed),
    )(x_in, w0, b0, w1, b1, w2, b2)

    # Unpack to the module's return signature.  (For perf-critical pipelines,
    # consume the packed slab directly instead -- see TODO at top of file.)
    log_pi = out[:, :K]
    mu = out[:, K:K + KD].reshape(-1, K, D)
    sigma = out[:, K + KD:K + 2 * KD].reshape(-1, K, D)
    return log_pi, mu, sigma


# ----------------------------------------------------------------------------
# Deterministic init (mimics nn.Linear uniform +/- 1/sqrt(fan_in)); weights
# stored as (in, out) -- i.e. nn.Linear.weight transposed.
# ----------------------------------------------------------------------------
def init_linear(key, fan_in, fan_out):
    kw, kb = jax.random.split(key)
    bound = 1.0 / jnp.sqrt(fan_in)
    w = jax.random.uniform(kw, (fan_in, fan_out), jnp.float32, -bound, bound)
    b = jax.random.uniform(kb, (1, fan_out), jnp.float32, -bound, bound)
    return w, b


def init_mdn_params(key, dim_in, dim_out, num_components, hidden_sizes):
    K, D = num_components, dim_out
    num_sigma = D * K  # NoiseType.DIAGONAL
    pi_sizes = (dim_in,) + tuple(hidden_sizes) + (K,)
    nm_sizes = (dim_in,) + tuple(hidden_sizes) + (D * K + num_sigma,)

    keys = jax.random.split(key, 6)
    params = {}
    for i in range(3):
        w, b = init_linear(keys[i], pi_sizes[i], pi_sizes[i + 1])
        params[f"pw{i}"], params[f"pb{i}"] = w, b
    for i in range(3):
        w, b = init_linear(keys[3 + i], nm_sizes[i], nm_sizes[i + 1])
        params[f"nw{i}"], params[f"nb{i}"] = w, b
    return params


if __name__ == "__main__":
    # Small config: dim_in=32, hidden=[32,32], num_components=5, dim_out=4, B=8
    dim_in, dim_out, num_components = 32, 4, 5
    hidden_sizes = [32, 32]
    batch = 8
    eps = 1e-6

    key = jax.random.PRNGKey(0)
    kx, kp = jax.random.split(key)
    x = jax.random.normal(kx, (batch, dim_in), jnp.float32)
    params = init_mdn_params(kp, dim_in, dim_out, num_components, hidden_sizes)
    packed, out_width = pack_mdn_params(
        params, num_components=num_components, dim_out=dim_out)

    log_pi, mu, sigma = mdn_forward(
        x, packed, out_width, num_components=num_components, dim_out=dim_out,
        eps=eps)
    jax.block_until_ready((log_pi, mu, sigma))

    # Plain-JAX f32 reference using the ORIGINAL (unfused) params.
    def ref(x):
        h = jnp.tanh(x @ params["pw0"] + params["pb0"])
        h = jnp.tanh(h @ params["pw1"] + params["pb1"])
        logits = h @ params["pw2"] + params["pb2"]
        lp = jax.nn.log_softmax(logits, axis=-1)
        g = jnp.tanh(x @ params["nw0"] + params["nb0"])
        g = jnp.tanh(g @ params["nw1"] + params["nb1"])
        p = g @ params["nw2"] + params["nb2"]
        md = num_components * dim_out
        m = p[:, :md].reshape(-1, num_components, dim_out)
        s = jnp.exp(p[:, md:] + eps).reshape(-1, num_components, dim_out)
        return lp, m, s

    lp_r, mu_r, s_r = ref(x)
    # Loose tolerance: the kernel stores x/weights in bf16 (MXU-native) while
    # the reference runs end-to-end in f32.
    assert jnp.allclose(log_pi, lp_r, rtol=5e-2, atol=5e-2), "log_pi mismatch"
    assert jnp.allclose(mu, mu_r, rtol=5e-2, atol=5e-2), "mu mismatch"
    assert jnp.allclose(sigma, s_r, rtol=5e-2, atol=5e-2), "sigma mismatch"

    print("KERNEL_OK")
</pallas_src>

<mosaic_0001>
module attributes {stable_mosaic.version = 11 : i64} {
  func.func @mdn_fused_kernel(%arg0: i32, %arg1: memref<8x32xbf16, #tpu.memory_space<vmem>>, %arg2: memref<32x128xbf16, #tpu.memory_space<vmem>>, %arg3: memref<1x128xf32, #tpu.memory_space<vmem>>, %arg4: memref<128x128xbf16, #tpu.memory_space<vmem>>, %arg5: memref<1x128xf32, #tpu.memory_space<vmem>>, %arg6: memref<128x128xbf16, #tpu.memory_space<vmem>>, %arg7: memref<1x128xf32, #tpu.memory_space<vmem>>, %arg8: memref<8x128xf32, #tpu.memory_space<vmem>>) attributes {dimension_semantics = [#tpu.dimension_semantics<parallel>], iteration_bounds = array<i64: 1>, scalar_prefetch = 0 : i64, scratch_operands = 0 : i64, tpu.core_type = #tpu.core_type<tc>, window_params = [{transform_indices = @transform_0, window_bounds = array<i64: 8, 32>}, {pipeline_mode = #tpu.pipeline_mode<synchronous>, transform_indices = @transform_1, window_bounds = array<i64: 32, 128>}, {pipeline_mode = #tpu.pipeline_mode<synchronous>, transform_indices = @transform_2, window_bounds = array<i64: 1, 128>}, {pipeline_mode = #tpu.pipeline_mode<synchronous>, transform_indices = @transform_3, window_bounds = array<i64: 128, 128>}, {pipeline_mode = #tpu.pipeline_mode<synchronous>, transform_indices = @transform_4, window_bounds = array<i64: 1, 128>}, {pipeline_mode = #tpu.pipeline_mode<synchronous>, transform_indices = @transform_5, window_bounds = array<i64: 128, 128>}, {pipeline_mode = #tpu.pipeline_mode<synchronous>, transform_indices = @transform_6, window_bounds = array<i64: 1, 128>}, {transform_indices = @transform_7, window_bounds = array<i64: 8, 128>}]} {
    %c0 = arith.constant 0 : index
    %c0_0 = arith.constant 0 : index
    %0 = vector.load %arg1[%c0, %c0_0] : memref<8x32xbf16, #tpu.memory_space<vmem>>, vector<8x32xbf16>
    %c0_1 = arith.constant 0 : index
    %c0_2 = arith.constant 0 : index
    %1 = vector.load %arg2[%c0_1, %c0_2] : memref<32x128xbf16, #tpu.memory_space<vmem>>, vector<32x128xbf16>
    %cst = arith.constant dense<0.000000e+00> : vector<8x128xf32>
    %2 = tpu.matmul %0, %1, %cst {dimension_numbers = #tpu.dot_dimension_numbers<[1], [0], [0], [1], [0, 0, 1, 1], [], []>} : vector<8x32xbf16>, vector<32x128xbf16>, vector<8x128xf32> -> vector<8x128xf32>
    %c0_3 = arith.constant 0 : index
    %c0_4 = arith.constant 0 : index
    %3 = vector.load %arg3[%c0_3, %c0_4] : memref<1x128xf32, #tpu.memory_space<vmem>>, vector<1x128xf32>
    %4 = vector.broadcast %3 : vector<1x128xf32> to vector<8x128xf32>
    %5 = arith.addf %2, %4 : vector<8x128xf32>
    %6 = math.tanh %5 : vector<8x128xf32>
    %7 = arith.truncf %6 : vector<8x128xf32> to vector<8x128xbf16>
    %c0_5 = arith.constant 0 : index
    %c0_6 = arith.constant 0 : index
    %8 = vector.load %arg4[%c0_5, %c0_6] : memref<128x128xbf16, #tpu.memory_space<vmem>>, vector<128x128xbf16>
    %cst_7 = arith.constant dense<0.000000e+00> : vector<8x128xf32>
    %9 = tpu.matmul %7, %8, %cst_7 {dimension_numbers = #tpu.dot_dimension_numbers<[1], [0], [0], [1], [0, 0, 1, 1], [], []>} : vector<8x128xbf16>, vector<128x128xbf16>, vector<8x128xf32> -> vector<8x128xf32>
    %c0_8 = arith.constant 0 : index
    %c0_9 = arith.constant 0 : index
    %10 = vector.load %arg5[%c0_8, %c0_9] : memref<1x128xf32, #tpu.memory_space<vmem>>, vector<1x128xf32>
    %11 = vector.broadcast %10 : vector<1x128xf32> to vector<8x128xf32>
    %12 = arith.addf %9, %11 : vector<8x128xf32>
    %13 = math.tanh %12 : vector<8x128xf32>
    %14 = arith.truncf %13 : vector<8x128xf32> to vector<8x128xbf16>
    %c0_10 = arith.constant 0 : index
    %c0_11 = arith.constant 0 : index
    %15 = vector.load %arg6[%c0_10, %c0_11] : memref<128x128xbf16, #tpu.memory_space<vmem>>, vector<128x128xbf16>
    %cst_12 = arith.constant dense<0.000000e+00> : vector<8x128xf32>
    %16 = tpu.matmul %14, %15, %cst_12 {dimension_numbers = #tpu.dot_dimension_numbers<[1], [0], [0], [1], [0, 0, 1, 1], [], []>} : vector<8x128xbf16>, vector<128x128xbf16>, vector<8x128xf32> -> vector<8x128xf32>
    %c0_13 = arith.constant 0 : index
    %c0_14 = arith.constant 0 : index
    %17 = vector.load %arg7[%c0_13, %c0_14] : memref<1x128xf32, #tpu.memory_space<vmem>>, vector<1x128xf32>
    %18 = vector.broadcast %17 : vector<1x128xf32> to vector<8x128xf32>
    %19 = arith.addf %16, %18 : vector<8x128xf32>
    %20 = tpu.iota {dimensions = array<i32: 1>} : vector<8x128xi32>
    %c5_i32 = arith.constant 5 : i32
    %21 = vector.broadcast %c5_i32 : i32 to vector<8x128xi32>
    %22 = arith.cmpi slt, %20, %21 : vector<8x128xi32>
    %c25_i32 = arith.constant 25 : i32
    %23 = vector.broadcast %c25_i32 : i32 to vector<8x128xi32>
    %24 = arith.cmpi sge, %20, %23 : vector<8x128xi32>
    %c45_i32 = arith.constant 45 : i32
    %25 = vector.broadcast %c45_i32 : i32 to vector<8x128xi32>
    %26 = arith.cmpi slt, %20, %25 : vector<8x128xi32>
    %27 = arith.andi %24, %26 : vector<8x128xi1>
    %cst_15 = arith.constant -1.000000e+30 : f32
    %28 = vector.broadcast %cst_15 : f32 to vector<8x128xf32>
    %29 = arith.select %22, %19, %28 : vector<8x128xi1>, vector<8x128xf32>
    %cst_16 = arith.constant dense<0xFF800000> : vector<8xf32>
    %30 = vector.multi_reduction <maximumf>, %29, %cst_16 [1] : vector<8x128xf32> to vector<8xf32>
    %31 = vector.shape_cast %30 : vector<8xf32> to vector<8x1xf32>
    %32 = vector.broadcast %31 : vector<8x1xf32> to vector<8x128xf32>
    %33 = arith.subf %19, %32 : vector<8x128xf32>
    %34 = math.exp %33 : vector<8x128xf32>
    %cst_17 = arith.constant 0.000000e+00 : f32
    %35 = vector.broadcast %cst_17 : f32 to vector<8x128xf32>
    %36 = arith.select %22, %34, %35 : vector<8x128xi1>, vector<8x128xf32>
    %cst_18 = arith.constant dense<0.000000e+00> : vector<8xf32>
    %37 = vector.multi_reduction <add>, %36, %cst_18 [1] : vector<8x128xf32> to vector<8xf32>
    %38 = vector.shape_cast %37 : vector<8xf32> to vector<8x1xf32>
    %39 = math.log %38 : vector<8x1xf32>
    %40 = vector.broadcast %39 : vector<8x1xf32> to vector<8x128xf32>
    %41 = arith.subf %33, %40 : vector<8x128xf32>
    %cst_19 = arith.constant 9.99999997E-7 : f32
    %42 = vector.broadcast %cst_19 : f32 to vector<8x128xf32>
    %43 = arith.addf %19, %42 : vector<8x128xf32>
    %44 = math.exp %43 : vector<8x128xf32>
    %45 = arith.select %27, %44, %19 : vector<8x128xi1>, vector<8x128xf32>
    %46 = arith.select %22, %41, %45 : vector<8x128xi1>, vector<8x128xf32>
    %c0_20 = arith.constant 0 : index
    %c0_21 = arith.constant 0 : index
    %47 = vector.load %arg8[%c0_20, %c0_21] : memref<8x128xf32, #tpu.memory_space<vmem>>, vector<8x128xf32>
    tpu.vector_store %arg8[%c0_20, %c0_21], %46 {strides = array<i32>} : memref<8x128xf32, #tpu.memory_space<vmem>>, vector<8x128xf32>,
    return
  }
  func.func @transform_0(%arg0: i32) -> (i32, i32) {
    %c0_i32 = arith.constant 0 : i32
    %c0_i32_0 = arith.constant 0 : i32
    return %arg0, %c0_i32 : i32, i32
  }
  func.func @transform_1(%arg0: i32) -> (i32, i32) {
    %c0_i32 = arith.constant 0 : i32
    %c0_i32_0 = arith.constant 0 : i32
    %c0_i32_1 = arith.constant 0 : i32
    return %c0_i32, %c0_i32_0 : i32, i32
  }
  func.func @transform_2(%arg0: i32) -> (i32, i32) {
    %c0_i32 = arith.constant 0 : i32
    %c0_i32_0 = arith.constant 0 : i32
    %c0_i32_1 = arith.constant 0 : i32
    return %c0_i32, %c0_i32_0 : i32, i32
  }
  func.func @transform_3(%arg0: i32) -> (i32, i32) {
    %c0_i32 = arith.constant 0 : i32
    %c0_i32_0 = arith.constant 0 : i32
    %c0_i32_1 = arith.constant 0 : i32
    return %c0_i32, %c0_i32_0 : i32, i32
  }
  func.func @transform_4(%arg0: i32) -> (i32, i32) {
    %c0_i32 = arith.constant 0 : i32
    %c0_i32_0 = arith.constant 0 : i32
    %c0_i32_1 = arith.constant 0 : i32
    return %c0_i32, %c0_i32_0 : i32, i32
  }
  func.func @transform_5(%arg0: i32) -> (i32, i32) {
    %c0_i32 = arith.constant 0 : i32
    %c0_i32_0 = arith.constant 0 : i32
    %c0_i32_1 = arith.constant 0 : i32
    return %c0_i32, %c0_i32_0 : i32, i32
  }
  func.func @transform_6(%arg0: i32) -> (i32, i32) {
    %c0_i32 = arith.constant 0 : i32
    %c0_i32_0 = arith.constant 0 : i32
    %c0_i32_1 = arith.constant 0 : i32
    return %c0_i32, %c0_i32_0 : i32, i32
  }
  func.func @transform_7(%arg0: i32) -> (i32, i32) {
    %c0_i32 = arith.constant 0 : i32
    %c0_i32_0 = arith.constant 0 : i32
    return %arg0, %c0_i32 : i32, i32
  }
}

</mosaic_0001>

<llo_original>
// kernel: tpu_custom_call.1
$region0: #{tpu_custom_call.1}
  #allocation0 [shape = 'u32[]', space=smem, size = 0x4, offset = 0x4, fixed_abs, tag = 'smem constant byte address 0x4 - core index']
  #allocation1 [shape = 'u32[144,128]{1,0:T(1,128)}', space=vmem, size = 0x12000, scoped, tag = 'internal scratch']
  %s0 = inlined_call_operand.hbm [shape: bf16[8,32], index: 0, kind: input, shape index: {}]
  %s1 = inlined_call_operand.hbm [shape: bf16[32,128], index: 1, kind: input, shape index: {}]
  %s2 = inlined_call_operand.vmem [shape: f32[1,128], index: 2, kind: input, shape index: {}]
  %s3 = inlined_call_operand.hbm [shape: bf16[128,128], index: 3, kind: input, shape index: {}]
  %s4 = inlined_call_operand.vmem [shape: f32[1,128], index: 4, kind: input, shape index: {}]
  %s5 = inlined_call_operand.hbm [shape: bf16[128,128], index: 5, kind: input, shape index: {}]
  %s6 = inlined_call_operand.vmem [shape: f32[1,128], index: 6, kind: input, shape index: {}]
  %s7 = inlined_call_operand.hbm [shape: f32[8,128], index: 7, kind: output, shape index: {}]
  %s8 = sld [smem:[#allocation0]]
  $region54: #{tpu_custom_call.1} parent=0
    _
  %s10 = ssub.s32 1, %s8
  %s11 = scalar_select 0, %s10, %s8
  $region1: #{tpu_custom_call.1} parent=0
    #allocation2 [shape = 'u8[2048]{0}', space=vmem, size = 0x800, scoped, tag = 'input window, operand 0, single buffered']
    #allocation3 [shape = 's32[1]{0}', space=sflag, size = 0x4, scoped, tag = 'scoped memory for tpu_custom_call.1']
    #allocation4 [shape = 's32[1]{0}', space=sflag, size = 0x4, scoped, tag = 'scoped memory for tpu_custom_call.1']
    #allocation5 [shape = 'u8[8192]{0}', space=vmem, size = 0x2000, scoped, tag = 'input window, operand 1, single buffered']
    #allocation6 [shape = 's32[1]{0}', space=sflag, size = 0x4, scoped, tag = 'scoped memory for tpu_custom_call.1']
    #allocation7 [shape = 'u8[32768]{0}', space=vmem, size = 0x8000, scoped, tag = 'input window, operand 3, single buffered']
    #allocation8 [shape = 'u8[32768]{0}', space=vmem, size = 0x8000, scoped, tag = 'input window, operand 5, single buffered']
    #allocation9 [shape = 's32[1]{0}', space=sflag, size = 0x4, scoped, tag = 'scoped memory for tpu_custom_call.1']
    #allocation10 [shape = 'u8[4096]{0}', space=vmem, size = 0x1000, scoped, tag = 'output window, operand 0, single buffered']
    %12 = vsyncpa [#allocation3], 0
    %13 = vsyncpa [#allocation6], 0
    %14 = vsyncpa [#allocation9], 0
    %15 = vsyncpa [#allocation4], 0
    // Predicated region
    $region2: #{tpu_custom_call.1} parent=1 // pred_check
      _
    $region3: #{tpu_custom_call.1} parent=1 // pred_check_branch
      %17 = sbr.rel (0) target = $region5
    $region4: #{tpu_custom_call.1} parent=1 // pred_region
      %s19 = ssub.s32 64, 64
      %20 = vsyncadd [#allocation3], %s19
      %s22 = sshll.u32 [#allocation2], 4
      %s23 = int_to_ptr.vmem [resolvable:$true] %s22
      %25 = dma.hbm_to_vmem [thread:$0]  %s0, 64, %s23, [#allocation3]
    $region5: #{tpu_custom_call.1} parent=1 // pred_fallthru
      _
    // Predicated region
    $region6: #{tpu_custom_call.1} parent=1 // pred_check
      _
    $region7: #{tpu_custom_call.1} parent=1 // pred_check_branch
      %27 = sbr.rel (0) target = $region9
    $region8: #{tpu_custom_call.1} parent=1 // pred_region
      %s29 = ssub.s32 256, 256
      %30 = vsyncadd [#allocation6], %s29
      %s31 = sshll.u32 [#allocation5], 4
      %s32 = int_to_ptr.vmem [resolvable:$true] %s31
      %37 = dma.hbm_to_vmem [thread:$0]  %s1, 256, %s32, [#allocation6], 64, 64, 4
    $region9: #{tpu_custom_call.1} parent=1 // pred_fallthru
      _
    // Predicated region
    $region10: #{tpu_custom_call.1} parent=1 // pred_check
      _
    $region11: #{tpu_custom_call.1} parent=1 // pred_check_branch
      %39 = sbr.rel (0) target = $region13
    $region12: #{tpu_custom_call.1} parent=1 // pred_region
      _
    $region13: #{tpu_custom_call.1} parent=1 // pred_fallthru
      _
    // Predicated region
    $region14: #{tpu_custom_call.1} parent=1 // pred_check
      _
    $region15: #{tpu_custom_call.1} parent=1 // pred_check_branch
      %41 = sbr.rel (0) target = $region17
    $region16: #{tpu_custom_call.1} parent=1 // pred_region
      %s43 = ssub.s32 1024, 1024
      %44 = vsyncadd [#allocation6], %s43
      %s45 = sshll.u32 [#allocation7], 4
      %s46 = int_to_ptr.vmem [resolvable:$true] %s45
      %51 = dma.hbm_to_vmem [thread:$0]  %s3, 1024, %s46, [#allocation6], 64, 64, 4
    $region17: #{tpu_custom_call.1} parent=1 // pred_fallthru
      _
    // Predicated region
    $region18: #{tpu_custom_call.1} parent=1 // pred_check
      _
    $region19: #{tpu_custom_call.1} parent=1 // pred_check_branch
      %53 = sbr.rel (0) target = $region21
    $region20: #{tpu_custom_call.1} parent=1 // pred_region
      _
    $region21: #{tpu_custom_call.1} parent=1 // pred_fallthru
      _
    // Predicated region
    $region22: #{tpu_custom_call.1} parent=1 // pred_check
      _
    $region23: #{tpu_custom_call.1} parent=1 // pred_check_branch
      %55 = sbr.rel (0) target = $region25
    $region24: #{tpu_custom_call.1} parent=1 // pred_region
      %s57 = ssub.s32 1024, 1024
      %58 = vsyncadd [#allocation9], %s57
      %s59 = sshll.u32 [#allocation8], 4
      %s60 = int_to_ptr.vmem [resolvable:$true] %s59
      %65 = dma.hbm_to_vmem [thread:$0]  %s5, 1024, %s60, [#allocation9], 64, 64, 4
    $region25: #{tpu_custom_call.1} parent=1 // pred_fallthru
      _
    // Predicated region
    $region26: #{tpu_custom_call.1} parent=1 // pred_check
      _
    $region27: #{tpu_custom_call.1} parent=1 // pred_check_branch
      %67 = sbr.rel (0) target = $region29
    $region28: #{tpu_custom_call.1} parent=1 // pred_region
      _
    $region29: #{tpu_custom_call.1} parent=1 // pred_fallthru
      _
    // Predicated region
    $region30: #{tpu_custom_call.1} parent=1 // pred_check
      _
    $region31: #{tpu_custom_call.1} parent=1 // pred_check_branch
      %69 = sbr.rel (0) target = $region33
    $region32: #{tpu_custom_call.1} parent=1 // pred_region
      %70 = dma.done [#allocation3], 64
    $region33: #{tpu_custom_call.1} parent=1 // pred_fallthru
      _
    // Predicated region
    $region34: #{tpu_custom_call.1} parent=1 // pred_check
      _
    $region35: #{tpu_custom_call.1} parent=1 // pred_check_branch
      %72 = sbr.rel (0) target = $region37
    $region36: #{tpu_custom_call.1} parent=1 // pred_region
      %73 = dma.done [#allocation6], 256
    $region37: #{tpu_custom_call.1} parent=1 // pred_fallthru
      _
    // Predicated region
    $region38: #{tpu_custom_call.1} parent=1 // pred_check
      _
    $region39: #{tpu_custom_call.1} parent=1 // pred_check_branch
      %75 = sbr.rel (0) target = $region41
    $region40: #{tpu_custom_call.1} parent=1 // pred_region
      %76 = dma.done [#allocation6], 1024
    $region41: #{tpu_custom_call.1} parent=1 // pred_fallthru
      _
    // Predicated region
    $region42: #{tpu_custom_call.1} parent=1 // pred_check
      _
    $region43: #{tpu_custom_call.1} parent=1 // pred_check_branch
      %78 = sbr.rel (0) target = $region45
    $region44: #{tpu_custom_call.1} parent=1 // pred_region
      %79 = dma.done [#allocation9], 1024
    $region45: #{tpu_custom_call.1} parent=1 // pred_fallthru
      _
    %v81 = vld [vmem:[#allocation2] sm:$0xf]
    %v82 = vld [vmem:[#allocation5] sm:$0xf]
    %v83 = vld [vmem:[#allocation5 + $0x4] sm:$0xf]
    %v84 = vld [vmem:[#allocation5 + $0x8] sm:$0xf]
    %v85 = vld [vmem:[#allocation5 + $0xc] sm:$0xf]
    %v86 = vld [vmem:[%s2] sm:$0x1]
    %v88 = vlaneseq
    %v89 = vshrl.u32 %v88, 7
    %v90 = vsub.s32 0, %v89
    %v91 = vrot.slane %v86, %v90
    %v97 = vunpack.c.l.b16 %v82
    %v98 = vunpack.c.l.b16 %v83
    %v99 = vunpack.c.l.b16 %v84
    %v100 = vunpack.c.l.b16 %v85
    %v101 = vpack.c.b16 %v98, %v97
    %v102 = vpack.c.b16 %v100, %v99
    %vm105 = vcmask 261120
    %v107 = vsel %vm105, %v81, 0
    %109 = vmatprep.subr.bf16.mxu0 0
    %110 = vmatpush1.bf16.msra.mxu0 %v101
    %111 = vmatprep.subr.bf16.mxu0 0
    %112 = vmatpush1.bf16.msra.mxu0 %v102
    %113 = vmatprep.subr.bf16.mxu0 0
    %114 = vmatpush1.bf16.msra.mxu0 0
    %115 = vmatprep.subr.bf16.mxu0 0
    %116 = vmatpush1.bf16.msra.mxu0 0
    %117 = vmatprep.subr.bf16.mxu0 0
    %118 = vmatpush1.bf16.msra.mxu0 0
    %119 = vmatprep.subr.bf16.mxu0 0
    %120 = vmatpush1.bf16.msra.mxu0 0
    %121 = vmatprep.subr.bf16.mxu0 0
    %122 = vmatpush1.bf16.msra.mxu0 0
    %123 = vmatprep.subr.bf16.mxu0 0
    %124 = vmatpush1.bf16.msra.mxu0 0
    %125 = vmatprep.subr.bf16.mxu0 0
    %126 = vmatpush1.bf16.msra.mxu0 0
    %127 = vmatprep.subr.bf16.mxu0 0
    %128 = vmatpush1.bf16.msra.mxu0 0
    %129 = vmatprep.subr.bf16.mxu0 0
    %130 = vmatpush1.bf16.msra.mxu0 0
    %131 = vmatprep.subr.bf16.mxu0 0
    %132 = vmatpush1.bf16.msra.mxu0 0
    %133 = vmatprep.subr.bf16.mxu0 0
    %134 = vmatpush1.bf16.msra.mxu0 0
    %135 = vmatprep.subr.bf16.mxu0 0
    %136 = vmatpush1.bf16.msra.mxu0 0
    %137 = vmatprep.subr.bf16.mxu0 0
    %138 = vmatpush1.bf16.msra.mxu0 0
    %139 = vmatprep.subr.bf16.mxu0 0
    %140 = vmatpush1.bf16.msra.mxu0 0
    %141 = vmatprep.mubr.bf16.mxu0 0
    %142 = vmatmul.mubr.bf16.gmra.mrb[0].mxu0 %v107
    %v143 = vpop.f32.mrb[0].mxu0
    %v144 = vadd.f32 %v91, %v143
    %v145 = vpop.f32.mrb[0].mxu0
    %v146 = vpop.f32.mrb[0].mxu0
    %v147 = vpop.f32.mrb[0].mxu0
    %148 = vdwg.mxu0
    %v149 = vtanh.pop %v144
    %v150 = vpack.c.bf16 %v149, %v149
    %v151 = vld [vmem:[#allocation7] sm:$0xf]
    %v152 = vld [vmem:[#allocation7 + $0x4] sm:$0xf]
    %v153 = vld [vmem:[#allocation7 + $0x8] sm:$0xf]
    %v154 = vld [vmem:[#allocation7 + $0xc] sm:$0xf]
    %v155 = vld [vmem:[#allocation7 + $0x10] sm:$0xf]
    %v156 = vld [vmem:[#allocation7 + $0x14] sm:$0xf]
    %v157 = vld [vmem:[#allocation7 + $0x18] sm:$0xf]
    %v158 = vld [vmem:[#allocation7 + $0x1c] sm:$0xf]
    %v159 = vld [vmem:[#allocation7 + $0x20] sm:$0xf]
    %v160 = vld [vmem:[#allocation7 + $0x24] sm:$0xf]
    %v161 = vld [vmem:[#allocation7 + $0x28] sm:$0xf]
    %v162 = vld [vmem:[#allocation7 + $0x2c] sm:$0xf]
    %v163 = vld [vmem:[#allocation7 + $0x30] sm:$0xf]
    %v164 = vld [vmem:[#allocation7 + $0x34] sm:$0xf]
    %v165 = vld [vmem:[#allocation7 + $0x38] sm:$0xf]
    %v166 = vld [vmem:[#allocation7 + $0x3c] sm:$0xf]
    %v167 = vld [vmem:[%s4] sm:$0x1]
    %v169 = vlaneseq
    %v170 = vshrl.u32 %v169, 7
    %v171 = vsub.s32 0, %v170
    %v172 = vrot.slane %v167, %v171
    %v190 = vunpack.c.l.b16 %v151
    %v191 = vunpack.c.l.b16 %v152
    %v192 = vunpack.c.l.b16 %v153
    %v193 = vunpack.c.l.b16 %v154
    %v194 = vunpack.c.l.b16 %v155
    %v195 = vunpack.c.l.b16 %v156
    %v196 = vunpack.c.l.b16 %v157
    %v197 = vunpack.c.l.b16 %v158
    %v198 = vunpack.c.l.b16 %v159
    %v199 = vunpack.c.l.b16 %v160
    %v200 = vunpack.c.l.b16 %v161
    %v201 = vunpack.c.l.b16 %v162
    %v202 = vunpack.c.l.b16 %v163
    %v203 = vunpack.c.l.b16 %v164
    %v204 = vunpack.c.l.b16 %v165
    %v205 = vunpack.c.l.b16 %v166
    %v206 = vpack.c.b16 %v191, %v190
    %v207 = vpack.c.b16 %v193, %v192
    %v208 = vpack.c.b16 %v195, %v194
    %v209 = vpack.c.b16 %v197, %v196
    %v210 = vpack.c.b16 %v199, %v198
    %v211 = vpack.c.b16 %v201, %v200
    %v212 = vpack.c.b16 %v203, %v202
    %v213 = vpack.c.b16 %v205, %v204
    %222 = vmatprep.subr.bf16.mxu0 0
    %223 = vmatpush1.bf16.msra.mxu0 %v206
    %224 = vmatprep.subr.bf16.mxu0 0
    %225 = vmatpush1.bf16.msra.mxu0 %v207
    %226 = vmatprep.subr.bf16.mxu0 0
    %227 = vmatpush1.bf16.msra.mxu0 %v208
    %228 = vmatprep.subr.bf16.mxu0 0
    %229 = vmatpush1.bf16.msra.mxu0 %v209
    %230 = vmatprep.subr.bf16.mxu0 0
    %231 = vmatpush1.bf16.msra.mxu0 %v210
    %232 = vmatprep.subr.bf16.mxu0 0
    %233 = vmatpush1.bf16.msra.mxu0 %v211
    %234 = vmatprep.subr.bf16.mxu0 0
    %235 = vmatpush1.bf16.msra.mxu0 %v212
    %236 = vmatprep.subr.bf16.mxu0 0
    %237 = vmatpush1.bf16.msra.mxu0 %v213
    %238 = vmatprep.subr.bf16.mxu0 0
    %239 = vmatpush1.bf16.msra.mxu0 0
    %240 = vmatprep.subr.bf16.mxu0 0
    %241 = vmatpush1.bf16.msra.mxu0 0
    %242 = vmatprep.subr.bf16.mxu0 0
    %243 = vmatpush1.bf16.msra.mxu0 0
    %244 = vmatprep.subr.bf16.mxu0 0
    %245 = vmatpush1.bf16.msra.mxu0 0
    %246 = vmatprep.subr.bf16.mxu0 0
    %247 = vmatpush1.bf16.msra.mxu0 0
    %248 = vmatprep.subr.bf16.mxu0 0
    %249 = vmatpush1.bf16.msra.mxu0 0
    %250 = vmatprep.subr.bf16.mxu0 0
    %251 = vmatpush1.bf16.msra.mxu0 0
    %252 = vmatprep.subr.bf16.mxu0 0
    %253 = vmatpush1.bf16.msra.mxu0 0
    %254 = vmatprep.mubr.bf16.mxu0 0
    %255 = vmatmul.mubr.bf16.gmra.mrb[0].mxu0 %v150
    %v256 = vpop.f32.mrb[0].mxu0
    %v257 = vadd.f32 %v172, %v256
    %v258 = vpop.f32.mrb[0].mxu0
    %v259 = vpop.f32.mrb[0].mxu0
    %v260 = vpop.f32.mrb[0].mxu0
    %261 = vdwg.mxu0
    %v262 = vtanh.pop %v257
    %v263 = vpack.c.bf16 %v262, %v262
    %v264 = vld [vmem:[#allocation8] sm:$0xf]
    %v265 = vld [vmem:[#allocation8 + $0x4] sm:$0xf]
    %v266 = vld [vmem:[#allocation8 + $0x8] sm:$0xf]
    %v267 = vld [vmem:[#allocation8 + $0xc] sm:$0xf]
    %v268 = vld [vmem:[#allocation8 + $0x10] sm:$0xf]
    %v269 = vld [vmem:[#allocation8 + $0x14] sm:$0xf]
    %v270 = vld [vmem:[#allocation8 + $0x18] sm:$0xf]
    %v271 = vld [vmem:[#allocation8 + $0x1c] sm:$0xf]
    %v272 = vld [vmem:[#allocation8 + $0x20] sm:$0xf]
    %v273 = vld [vmem:[#allocation8 + $0x24] sm:$0xf]
    %v274 = vld [vmem:[#allocation8 + $0x28] sm:$0xf]
    %v275 = vld [vmem:[#allocation8 + $0x2c] sm:$0xf]
    %v276 = vld [vmem:[#allocation8 + $0x30] sm:$0xf]
    %v277 = vld [vmem:[#allocation8 + $0x34] sm:$0xf]
    %v278 = vld [vmem:[#allocation8 + $0x38] sm:$0xf]
    %v279 = vld [vmem:[#allocation8 + $0x3c] sm:$0xf]
    %v280 = vld [vmem:[%s6] sm:$0x1]
    %v282 = vlaneseq
    %v283 = vshrl.u32 %v282, 7
    %v284 = vsub.s32 0, %v283
    %v285 = vrot.slane %v280, %v284
    %v303 = vunpack.c.l.b16 %v264
    %v304 = vunpack.c.l.b16 %v265
    %v305 = vunpack.c.l.b16 %v266
    %v306 = vunpack.c.l.b16 %v267
    %v307 = vunpack.c.l.b16 %v268
    %v308 = vunpack.c.l.b16 %v269
    %v309 = vunpack.c.l.b16 %v270
    %v310 = vunpack.c.l.b16 %v271
    %v311 = vunpack.c.l.b16 %v272
    %v312 = vunpack.c.l.b16 %v273
    %v313 = vunpack.c.l.b16 %v274
    %v314 = vunpack.c.l.b16 %v275
    %v315 = vunpack.c.l.b16 %v276
    %v316 = vunpack.c.l.b16 %v277
    %v317 = vunpack.c.l.b16 %v278
    %v318 = vunpack.c.l.b16 %v279
    %v319 = vpack.c.b16 %v304, %v303
    %v320 = vpack.c.b16 %v306, %v305
    %v321 = vpack.c.b16 %v308, %v307
    %v322 = vpack.c.b16 %v310, %v309
    %v323 = vpack.c.b16 %v312, %v311
    %v324 = vpack.c.b16 %v314, %v313
    %v325 = vpack.c.b16 %v316, %v315
    %v326 = vpack.c.b16 %v318, %v317
    %335 = vmatprep.subr.bf16.mxu0 0
    %336 = vmatpush1.bf16.msra.mxu0 %v319
    %337 = vmatprep.subr.bf16.mxu0 0
    %338 = vmatpush1.bf16.msra.mxu0 %v320
    %339 = vmatprep.subr.bf16.mxu0 0
    %340 = vmatpush1.bf16.msra.mxu0 %v321
    %341 = vmatprep.subr.bf16.mxu0 0
    %342 = vmatpush1.bf16.msra.mxu0 %v322
    %343 = vmatprep.subr.bf16.mxu0 0
    %344 = vmatpush1.bf16.msra.mxu0 %v323
    %345 = vmatprep.subr.bf16.mxu0 0
    %346 = vmatpush1.bf16.msra.mxu0 %v324
    %347 = vmatprep.subr.bf16.mxu0 0
    %348 = vmatpush1.bf16.msra.mxu0 %v325
    %349 = vmatprep.subr.bf16.mxu0 0
    %350 = vmatpush1.bf16.msra.mxu0 %v326
    %351 = vmatprep.subr.bf16.mxu0 0
    %352 = vmatpush1.bf16.msra.mxu0 0
    %353 = vmatprep.subr.bf16.mxu0 0
    %354 = vmatpush1.bf16.msra.mxu0 0
    %355 = vmatprep.subr.bf16.mxu0 0
    %356 = vmatpush1.bf16.msra.mxu0 0
    %357 = vmatprep.subr.bf16.mxu0 0
    %358 = vmatpush1.bf16.msra.mxu0 0
    %359 = vmatprep.subr.bf16.mxu0 0
    %360 = vmatpush1.bf16.msra.mxu0 0
    %361 = vmatprep.subr.bf16.mxu0 0
    %362 = vmatpush1.bf16.msra.mxu0 0
    %363 = vmatprep.subr.bf16.mxu0 0
    %364 = vmatpush1.bf16.msra.mxu0 0
    %365 = vmatprep.subr.bf16.mxu0 0
    %366 = vmatpush1.bf16.msra.mxu0 0
    %367 = vmatprep.mubr.bf16.mxu0 0
    %368 = vmatmul.mubr.bf16.gmra.mrb[0].mxu0 %v263
    %v369 = vpop.f32.mrb[0].mxu0
    %v370 = vadd.f32 %v285, %v369
    %v371 = vpop.f32.mrb[0].mxu0
    %v372 = vpop.f32.mrb[0].mxu0
    %v373 = vpop.f32.mrb[0].mxu0
    %374 = vdwg.mxu0
    %v375 = vlaneseq
    %v376 = vand.u32 %v375, 127
    %vm377 = vcmp.lt.s32.totalorder %v376, 5
    %vm378 = vcmp.ge.s32.totalorder %v376, 25
    %vm379 = vcmp.lt.s32.totalorder %v376, 45
    %vm380 = vmand %vm378, %vm379
    %v381 = vsel %vm377, %v370, -1e+30
    %382 = vmax.xlane.f32.xlu0 %v381
    %v383 = vpop.xlane.xlu0 %382
    %v384 = vsub.f32 %v370, %v383
    %v385 = vmul.f32 %v384, 1.442695
    %v386 = vpow.pop %v385
    %v387 = vsel %vm377, %v386, 0.0
    %388 = vadd.xlane.f32.xlu0 %v387
    %v389 = vpop.xlane.xlu0 %388
    %v390 = vlog2.pop %v389
    %v391 = vmul.f32 %v390, 0.6931472
    %v392 = vsub.f32 %v384, %v391
    %v393 = vadd.f32 %v370, 1e-06
    %v394 = vmul.f32 %v393, 1.442695
    %v395 = vpow.pop %v394
    %v396 = vsel %vm380, %v395, %v370
    %v397 = vsel %vm377, %v392, %v396
    %398 = vst [vmem:[#allocation10] sm:$0xff] %v397
    // Predicated region
    $region46: #{tpu_custom_call.1} parent=1 // pred_check
      _
    $region47: #{tpu_custom_call.1} parent=1 // pred_check_branch
      %400 = sbr.rel (0) target = $region49
    $region48: #{tpu_custom_call.1} parent=1 // pred_region
      %s402 = ssub.s32 128, 128
      %403 = vsyncadd [#allocation4], %s402
      %s405 = sshll.u32 [#allocation10], 4
      %s406 = int_to_ptr.vmem [resolvable:$true] %s405
      %408 = dma.vmem_to_hbm [thread:$0]  %s406, 128, %s7, [#allocation4]
    $region49: #{tpu_custom_call.1} parent=1 // pred_fallthru
      _
    // Predicated region
    $region50: #{tpu_custom_call.1} parent=1 // pred_check
      _
    $region51: #{tpu_custom_call.1} parent=1 // pred_check_branch
      %410 = sbr.rel (0) target = $region53
    $region52: #{tpu_custom_call.1} parent=1 // pred_region
      %411 = dma.done [#allocation4], 128
    $region53: #{tpu_custom_call.1} parent=1 // pred_fallthru
      _
    %412 = vsyncpa [#allocation3], 1
    %413 = vsyncpa [#allocation6], 1
    %414 = vsyncpa [#allocation9], 1
    %415 = vsyncpa [#allocation4], 1

</llo_original>
